<compile_context>
chip_gen: v5e
topology: v5e:2x2
jax: 0.10.0
libtpu: 0.0.40
codegen_flags: <defaults>
</compile_context>

<pallas_src>
import functools

import jax
import jax.numpy as jnp
from jax.experimental import pallas as pl
from jax.experimental.pallas import tpu as pltpu


def _cdiv(a, b):
    return -(-a // b)


def _vmem_budget_bytes():
    """~Half of physical VMEM (generation-aware), conservative fallback."""
    try:
        cap = int(pltpu.get_tpu_info().vmem_capacity_bytes)
    except Exception:
        cap = 64 << 20  # v7x-sized fallback; safe on every generation
    return max(16 << 20, cap // 2)


def _num_tensorcores():
    """Best-effort TC-per-chip query; 1 (no-op) if unavailable."""
    try:
        info = pltpu.get_tpu_info()
        for name in ("num_cores", "core_count", "num_tensorcores"):
            v = getattr(info, name, None)
            if v:
                return int(v)
    except Exception:
        pass
    return 1


def _outconv_kernel(x_ref, w_ref, b_ref, o_ref, *, nb):
    # x_ref: (nb, C_in, ts)   nb batch elements x one spatial tile (lane = spatial)
    # w_ref: (C_out, C_in)    full weight matrix, resident across grid steps
    # b_ref: (C_out, 1)       bias column (f32), resident
    # o_ref: (nb, C_out, ts)  lane-dense output tile
    w = w_ref[...]
    bias = b_ref[...]                      # (C_out, 1) broadcasts over lane axis
    for b in range(nb):                    # static unroll; nb is a small Python int
        acc = jnp.dot(w, x_ref[b], preferred_element_type=jnp.float32)
        o_ref[b] = (acc + bias).astype(o_ref.dtype)


def out_conv_1x1(x_nchw, weight, bias, *, compute_dtype=None, max_spatial_tile=32768):
    """Forward of nn.Conv2d(C_in, C_out, kernel_size=1).

    x_nchw: (N, C_in, H, W); weight: (C_out, C_in, 1, 1); bias: (C_out,)
    compute_dtype: optional narrower dtype (e.g. jnp.bfloat16) for x/weight/out;
                   accumulation and bias add remain f32.
    returns (N, C_out, H, W)
    """
    N, C_in, H, W = x_nchw.shape
    C_out = weight.shape[0]
    HW = H * W

    in_dtype = jnp.dtype(compute_dtype) if compute_dtype is not None else jnp.dtype(x_nchw.dtype)
    out_dtype = in_dtype

    # Free reshapes (no transpose, no extra HBM traffic of the activations).
    x3d = x_nchw.reshape(N, C_in, HW).astype(in_dtype)
    w2d = weight.reshape(C_out, C_in).astype(in_dtype)
    b2d = bias.reshape(C_out, 1).astype(jnp.float32)

    itemsize = in_dtype.itemsize
    out_itemsize = jnp.dtype(out_dtype).itemsize
    vmem_budget = _vmem_budget_bytes()

    # Per-grid-step VMEM footprint: double-buffered x + out blocks plus the
    # (double-buffered, DMA'd-once) resident weight/bias.
    weight_bytes = C_out * C_in * itemsize + C_out * 4

    def step_bytes(nb, ts):
        return 2 * nb * ts * (C_in * itemsize + C_out * out_itemsize) + 2 * weight_bytes

    # --- Spatial (lane) tile: as big as the VMEM budget allows. -------------
    if HW <= 128 or (HW <= max_spatial_tile and step_bytes(1, HW) <= vmem_budget):
        ts = HW                                  # full-extent block: always legal
    else:
        ts = max(128, (min(HW, max_spatial_tile) // 128) * 128)
        while ts > 128 and step_bytes(1, ts) > vmem_budget:
            ts = max(128, ((ts // 2) // 128) * 128)
    ns = _cdiv(HW, ts)                           # partial last tile -> masked writeback

    # --- Small-feature-map regime: batch several N per grid step. -----------
    nb = 1
    if ns == 1 and N > 1:
        for cand in range(min(N, 16), 0, -1):    # largest divisor of N <= 16 that fits
            if N % cand == 0 and step_bytes(cand, ts) <= vmem_budget:
                nb = cand
                break

    # --- Keep >= #TensorCores programs on the parallel axes (v7x megacore). --
    num_tc = _num_tensorcores()
    while num_tc > 1 and (_cdiv(N, nb) * ns) < num_tc:
        if nb > 1:
            nb = max(1, nb // 2)
            while N % nb:
                nb -= 1
        elif ts > 128:
            ts = max(128, ((ts // 2) // 128) * 128)
            ns = _cdiv(HW, ts)
        else:
            break

    grid = (_cdiv(N, nb), ns)

    cost = pl.CostEstimate(
        flops=2 * N * HW * C_in * C_out,
        transcendentals=0,
        bytes_accessed=(N * C_in * HW * itemsize
                        + C_out * C_in * itemsize
                        + C_out * 4
                        + N * C_out * HW * out_itemsize),
    )

    kernel = functools.partial(_outconv_kernel, nb=nb)

    out3d = pl.pallas_call(
        kernel,
        out_shape=jax.ShapeDtypeStruct((N, C_out, HW), out_dtype),
        grid_spec=pltpu.PrefetchScalarGridSpec(
            num_scalar_prefetch=0,
            grid=grid,
            in_specs=[
                pl.BlockSpec((nb, C_in, ts), lambda n, s: (n, 0, s)),
                pl.BlockSpec((C_out, C_in), lambda n, s: (0, 0)),   # resident weight
                pl.BlockSpec((C_out, 1), lambda n, s: (0, 0)),      # resident bias
            ],
            out_specs=pl.BlockSpec((nb, C_out, ts), lambda n, s: (n, 0, s)),
        ),
        compiler_params=pltpu.CompilerParams(
            dimension_semantics=("parallel", "parallel"),   # megacore/2-TC sharding
            vmem_limit_bytes=int(vmem_budget),              # unlock > scoped default
        ),
        cost_estimate=cost,
    )(x3d, w2d, b2d)

    # Free reshape back to NCHW.
    return out3d.reshape(N, C_out, H, W)


if __name__ == "__main__":
    # Deterministic synthetic parameters & inputs (no checkpoint load).
    key = jax.random.PRNGKey(0)
    k_x, k_w, k_b = jax.random.split(key, 3)

    N, C_in, C_out, H, W = 2, 4, 3, 16, 16

    x = jax.random.normal(k_x, (N, C_in, H, W), dtype=jnp.float32)
    weight = jax.random.normal(k_w, (C_out, C_in, 1, 1), dtype=jnp.float32) * 0.1
    bias = jax.random.normal(k_b, (C_out,), dtype=jnp.float32) * 0.1

    out = out_conv_1x1(x, weight, bias)
    out = jax.block_until_ready(out)

    # Reference check against plain-JAX 1x1 conv (einsum over channels).
    ref = jnp.einsum("nchw,oc->nohw", x, weight.reshape(C_out, C_in)) + bias[None, :, None, None]
    assert out.shape == (N, C_out, H, W)
    assert jnp.allclose(out, ref, atol=1e-5, rtol=1e-5)

    print("KERNEL_OK")
</pallas_src>

<mosaic_0001>
module attributes {stable_mosaic.version = 11 : i64} {
  func.func @_outconv_kernel(%arg0: i32, %arg1: i32, %arg2: memref<2x4x256xf32, #tpu.memory_space<vmem>>, %arg3: memref<3x4xf32, #tpu.memory_space<vmem>>, %arg4: memref<3x1xf32, #tpu.memory_space<vmem>>, %arg5: memref<2x3x256xf32, #tpu.memory_space<vmem>>) attributes {dimension_semantics = [#tpu.dimension_semantics<parallel>, #tpu.dimension_semantics<parallel>], iteration_bounds = array<i64: 1, 1>, scalar_prefetch = 0 : i64, scratch_operands = 0 : i64, tpu.core_type = #tpu.core_type<tc>, window_params = [{transform_indices = @transform_0, window_bounds = array<i64: 2, 4, 256>}, {pipeline_mode = #tpu.pipeline_mode<synchronous>, transform_indices = @transform_1, window_bounds = array<i64: 3, 4>}, {pipeline_mode = #tpu.pipeline_mode<synchronous>, transform_indices = @transform_2, window_bounds = array<i64: 3, 1>}, {transform_indices = @transform_3, window_bounds = array<i64: 2, 3, 256>}]} {
    %c0 = arith.constant 0 : index
    %c0_0 = arith.constant 0 : index
    %0 = vector.load %arg3[%c0, %c0_0] : memref<3x4xf32, #tpu.memory_space<vmem>>, vector<3x4xf32>
    %c0_1 = arith.constant 0 : index
    %c0_2 = arith.constant 0 : index
    %1 = vector.load %arg4[%c0_1, %c0_2] : memref<3x1xf32, #tpu.memory_space<vmem>>, vector<3x1xf32>
    %c0_3 = arith.constant 0 : index
    %c0_4 = arith.constant 0 : index
    %c0_5 = arith.constant 0 : index
    %2 = vector.load %arg2[%c0_3, %c0_4, %c0_5] : memref<2x4x256xf32, #tpu.memory_space<vmem>>, vector<1x4x256xf32>
    %3 = vector.shape_cast %2 : vector<1x4x256xf32> to vector<4x256xf32>
    %cst = arith.constant dense<0.000000e+00> : vector<3x256xf32>
    %4 = tpu.matmul %0, %3, %cst {dimension_numbers = #tpu.dot_dimension_numbers<[1], [0], [0], [1], [0, 0, 1, 1], [], []>} : vector<3x4xf32>, vector<4x256xf32>, vector<3x256xf32> -> vector<3x256xf32>
    %5 = vector.broadcast %1 : vector<3x1xf32> to vector<3x256xf32>
    %6 = arith.addf %4, %5 : vector<3x256xf32>
    %c0_6 = arith.constant 0 : index
    %c0_7 = arith.constant 0 : index
    %c0_8 = arith.constant 0 : index
    %7 = vector.load %arg5[%c0_6, %c0_7, %c0_8] : memref<2x3x256xf32, #tpu.memory_space<vmem>>, vector<1x3x256xf32>
    %8 = vector.shape_cast %7 : vector<1x3x256xf32> to vector<3x256xf32>
    %9 = vector.shape_cast %6 : vector<3x256xf32> to vector<1x3x256xf32>
    tpu.vector_store %arg5[%c0_6, %c0_7, %c0_8], %9 {strides = array<i32>} : memref<2x3x256xf32, #tpu.memory_space<vmem>>, vector<1x3x256xf32>,
    %c1 = arith.constant 1 : index
    %c0_9 = arith.constant 0 : index
    %c0_10 = arith.constant 0 : index
    %10 = vector.load %arg2[%c1, %c0_9, %c0_10] : memref<2x4x256xf32, #tpu.memory_space<vmem>>, vector<1x4x256xf32>
    %11 = vector.shape_cast %10 : vector<1x4x256xf32> to vector<4x256xf32>
    %cst_11 = arith.constant dense<0.000000e+00> : vector<3x256xf32>
    %12 = tpu.matmul %0, %11, %cst_11 {dimension_numbers = #tpu.dot_dimension_numbers<[1], [0], [0], [1], [0, 0, 1, 1], [], []>} : vector<3x4xf32>, vector<4x256xf32>, vector<3x256xf32> -> vector<3x256xf32>
    %13 = vector.broadcast %1 : vector<3x1xf32> to vector<3x256xf32>
    %14 = arith.addf %12, %13 : vector<3x256xf32>
    %c1_12 = arith.constant 1 : index
    %c0_13 = arith.constant 0 : index
    %c0_14 = arith.constant 0 : index
    %15 = vector.load %arg5[%c1_12, %c0_13, %c0_14] : memref<2x3x256xf32, #tpu.memory_space<vmem>>, vector<1x3x256xf32>
    %16 = vector.shape_cast %15 : vector<1x3x256xf32> to vector<3x256xf32>
    %17 = vector.shape_cast %14 : vector<3x256xf32> to vector<1x3x256xf32>
    tpu.vector_store %arg5[%c1_12, %c0_13, %c0_14], %17 {strides = array<i32>} : memref<2x3x256xf32, #tpu.memory_space<vmem>>, vector<1x3x256xf32>,
    return
  }
  func.func @transform_0(%arg0: i32, %arg1: i32) -> (i32, i32, i32) {
    %c0_i32 = arith.constant 0 : i32
    %c0_i32_0 = arith.constant 0 : i32
    return %arg0, %c0_i32, %arg1 : i32, i32, i32
  }
  func.func @transform_1(%arg0: i32, %arg1: i32) -> (i32, i32) {
    %c0_i32 = arith.constant 0 : i32
    %c0_i32_0 = arith.constant 0 : i32
    %c0_i32_1 = arith.constant 0 : i32
    return %c0_i32, %c0_i32_0 : i32, i32
  }
  func.func @transform_2(%arg0: i32, %arg1: i32) -> (i32, i32) {
    %c0_i32 = arith.constant 0 : i32
    %c0_i32_0 = arith.constant 0 : i32
    %c0_i32_1 = arith.constant 0 : i32
    return %c0_i32, %c0_i32_0 : i32, i32
  }
  func.func @transform_3(%arg0: i32, %arg1: i32) -> (i32, i32, i32) {
    %c0_i32 = arith.constant 0 : i32
    %c0_i32_0 = arith.constant 0 : i32
    return %arg0, %c0_i32, %arg1 : i32, i32, i32
  }
}

</mosaic_0001>

<llo_original>
// kernel: tpu_custom_call.1
$region0: #{tpu_custom_call.1}
  #allocation0 [shape = 'u32[]', space=smem, size = 0x4, offset = 0x4, fixed_abs, tag = 'smem constant byte address 0x4 - core index']
  #allocation1 [shape = 'u32[72,128]{1,0:T(1,128)}', space=vmem, size = 0x9000, scoped, tag = 'internal scratch']
  %s0 = inlined_call_operand.hbm [shape: f32[2,4,256], index: 0, kind: input, shape index: {}]
  %s1 = inlined_call_operand.vmem [shape: f32[3,4], index: 1, kind: input, shape index: {}]
  %s2 = inlined_call_operand.vmem [shape: f32[3,1], index: 2, kind: input, shape index: {}]
  %s3 = inlined_call_operand.vmem [shape: f32[2,3,256], index: 3, kind: output, shape index: {}]
  %s4 = sld [smem:[#allocation0]]
  $region26: #{tpu_custom_call.1} parent=0
    _
  %s6 = ssub.s32 1, %s4
  %s7 = scalar_select 0, %s6, %s4
  $region1: #{tpu_custom_call.1} parent=0
    #allocation2 [shape = 'u8[8192]{0}', space=vmem, size = 0x2000, scoped, tag = 'input window, operand 0, single buffered']
    #allocation3 [shape = 's32[1]{0}', space=sflag, size = 0x4, scoped, tag = 'scoped memory for tpu_custom_call.1']
    %8 = vsyncpa [#allocation3], 0
    // Predicated region
    $region2: #{tpu_custom_call.1} parent=1 // pred_check
      _
    $region3: #{tpu_custom_call.1} parent=1 // pred_check_branch
      %10 = sbr.rel (0) target = $region5
    $region4: #{tpu_custom_call.1} parent=1 // pred_region
      %12 = vsyncadd [#allocation3], 0
      %s13 = sshll.u32 %s0, 4
      %s14 = int_to_ptr.hbm [resolvable:$true] %s13
      %s15 = sshll.u32 [#allocation2], 4
      %s16 = int_to_ptr.vmem [resolvable:$true] %s15
      %21 = dma.hbm_to_vmem [thread:$0]  %s14, 256, %s16, [#allocation3], 128, 128, 8
    $region5: #{tpu_custom_call.1} parent=1 // pred_fallthru
      _
    // Predicated region
    $region6: #{tpu_custom_call.1} parent=1 // pred_check
      _
    $region7: #{tpu_custom_call.1} parent=1 // pred_check_branch
      %23 = sbr.rel (0) target = $region9
    $region8: #{tpu_custom_call.1} parent=1 // pred_region
      _
    $region9: #{tpu_custom_call.1} parent=1 // pred_fallthru
      _
    // Predicated region
    $region10: #{tpu_custom_call.1} parent=1 // pred_check
      _
    $region11: #{tpu_custom_call.1} parent=1 // pred_check_branch
      %25 = sbr.rel (0) target = $region13
    $region12: #{tpu_custom_call.1} parent=1 // pred_region
      _
    $region13: #{tpu_custom_call.1} parent=1 // pred_fallthru
      _
    // Predicated region
    $region14: #{tpu_custom_call.1} parent=1 // pred_check
      _
    $region15: #{tpu_custom_call.1} parent=1 // pred_check_branch
      %27 = sbr.rel (0) target = $region17
    $region16: #{tpu_custom_call.1} parent=1 // pred_region
      %29 = dma.done [#allocation3], 256
    $region17: #{tpu_custom_call.1} parent=1 // pred_fallthru
      _
    %v30 = vld [vmem:[%s1] sm:$0x7]
    %v31 = vld [vmem:[%s2] sm:$0x7]
    %v32 = vld [vmem:[#allocation2] sm:$0xff]
    %34 = vset.pattern.permute.xlu0 0
    %35 = vperm.xlu0 %34, %v31
    %v36 = vpop.permute.xlu0 %35
    %39 = vst [vmem:[#allocation1] ss:$2 sm:$0xff] %v32
    %v40 = vld.sshfl [vmem:[#allocation1] sm:$0xff pattern:$0x75316420]
    %v41 = vld.sshfl [vmem:[#allocation1 + $0x8] sm:$0xff pattern:$0x75316420]
    %vm42 = vcmask 31744
    %v44 = vsel %vm42, %v30, 0
    %vm46 = vcmask 1043456
    %v47 = vsel %vm46, %v40, 0
    %v49 = vsel %vm46, %v41, 0
    %51 = vmatpush.msra.mxu0 0.0
    %52 = vmatpush.msra.mxu0 0.0
    %53 = vmatpush.msra.mxu0 0.0
    %54 = vmatpush.msra.mxu0 0.0
    %55 = vmatpush.msra.mxu0 0.0
    %56 = vmatpush.msra.mxu0 0.0
    %57 = vmatpush.msra.mxu0 0.0
    %58 = vmatpush.msra.mxu0 0.0
    %59 = vmatpush.msra.mxu0 0.0
    %60 = vmatpush.msra.mxu0 0.0
    %61 = vmatpush.msra.mxu0 0.0
    %62 = vmatpush.msra.mxu0 0.0
    %63 = vmatpush.msra.mxu0 0.0
    %64 = vmatpush.msra.mxu0 0.0
    %65 = vmatpush.msra.mxu0 0.0
    %66 = vmatpush.msra.mxu0 %v47
    %67 = vmatmul.f32.gmra.mxu0 %v44
    %v68 = vpop.f32.mrf.mxu0
    %v69 = vadd.f32 %v36, %v68
    %70 = vdwg.mxu0
    %71 = vmatpush.msra.mxu0 0.0
    %72 = vmatpush.msra.mxu0 0.0
    %73 = vmatpush.msra.mxu0 0.0
    %74 = vmatpush.msra.mxu0 0.0
    %75 = vmatpush.msra.mxu0 0.0
    %76 = vmatpush.msra.mxu0 0.0
    %77 = vmatpush.msra.mxu0 0.0
    %78 = vmatpush.msra.mxu0 0.0
    %79 = vmatpush.msra.mxu0 0.0
    %80 = vmatpush.msra.mxu0 0.0
    %81 = vmatpush.msra.mxu0 0.0
    %82 = vmatpush.msra.mxu0 0.0
    %83 = vmatpush.msra.mxu0 0.0
    %84 = vmatpush.msra.mxu0 0.0
    %85 = vmatpush.msra.mxu0 0.0
    %86 = vmatpush.msra.mxu0 %v49
    %87 = vmatmul.f32.gmra.mxu0 %v44
    %v88 = vpop.f32.mrf.mxu0
    %v89 = vadd.f32 %v36, %v88
    %90 = vdwg.mxu0
    %v93 = vrot.slane %v89, 4
    %v94 = vsel %vm46, %v69, %v93
    %96 = vst [vmem:[%s3] sm:$0x77] %v94
    %s97 = scalar_lea.vmem [#allocation2], 8
    %v98 = vld [vmem:[%s97] sm:$0xff]
    %100 = vst [vmem:[#allocation1] ss:$2 sm:$0xff] %v98
    %v101 = vld.sshfl [vmem:[#allocation1] sm:$0xff pattern:$0x75316420]
    %v102 = vld.sshfl [vmem:[#allocation1 + $0x8] sm:$0xff pattern:$0x75316420]
    %v103 = vsel %vm46, %v101, 0
    %v105 = vsel %vm46, %v102, 0
    %107 = vmatpush.msra.mxu0 0.0
    %108 = vmatpush.msra.mxu0 0.0
    %109 = vmatpush.msra.mxu0 0.0
    %110 = vmatpush.msra.mxu0 0.0
    %111 = vmatpush.msra.mxu0 0.0
    %112 = vmatpush.msra.mxu0 0.0
    %113 = vmatpush.msra.mxu0 0.0
    %114 = vmatpush.msra.mxu0 0.0
    %115 = vmatpush.msra.mxu0 0.0
    %116 = vmatpush.msra.mxu0 0.0
    %117 = vmatpush.msra.mxu0 0.0
    %118 = vmatpush.msra.mxu0 0.0
    %119 = vmatpush.msra.mxu0 0.0
    %120 = vmatpush.msra.mxu0 0.0
    %121 = vmatpush.msra.mxu0 0.0
    %122 = vmatpush.msra.mxu0 %v103
    %123 = vmatmul.f32.gmra.mxu0 %v44
    %v124 = vpop.f32.mrf.mxu0
    %v125 = vadd.f32 %v36, %v124
    %126 = vdwg.mxu0
    %127 = vmatpush.msra.mxu0 0.0
    %128 = vmatpush.msra.mxu0 0.0
    %129 = vmatpush.msra.mxu0 0.0
    %130 = vmatpush.msra.mxu0 0.0
    %131 = vmatpush.msra.mxu0 0.0
    %132 = vmatpush.msra.mxu0 0.0
    %133 = vmatpush.msra.mxu0 0.0
    %134 = vmatpush.msra.mxu0 0.0
    %135 = vmatpush.msra.mxu0 0.0
    %136 = vmatpush.msra.mxu0 0.0
    %137 = vmatpush.msra.mxu0 0.0
    %138 = vmatpush.msra.mxu0 0.0
    %139 = vmatpush.msra.mxu0 0.0
    %140 = vmatpush.msra.mxu0 0.0
    %141 = vmatpush.msra.mxu0 0.0
    %142 = vmatpush.msra.mxu0 %v105
    %143 = vmatmul.f32.gmra.mxu0 %v44
    %v144 = vpop.f32.mrf.mxu0
    %v145 = vadd.f32 %v36, %v144
    %146 = vdwg.mxu0
    %v149 = vrot.slane %v145, 4
    %v150 = vsel %vm46, %v125, %v149
    %s152 = scalar_lea.vmem %s3, 8
    %153 = vst [vmem:[%s152] sm:$0x77] %v150
    // Predicated region
    $region18: #{tpu_custom_call.1} parent=1 // pred_check
      _
    $region19: #{tpu_custom_call.1} parent=1 // pred_check_branch
      %155 = sbr.rel (0) target = $region21
    $region20: #{tpu_custom_call.1} parent=1 // pred_region
      _
    $region21: #{tpu_custom_call.1} parent=1 // pred_fallthru
      _
    // Predicated region
    $region22: #{tpu_custom_call.1} parent=1 // pred_check
      _
    $region23: #{tpu_custom_call.1} parent=1 // pred_check_branch
      %157 = sbr.rel (0) target = $region25
    $region24: #{tpu_custom_call.1} parent=1 // pred_region
      _
    $region25: #{tpu_custom_call.1} parent=1 // pred_fallthru
      _
    %158 = vsyncpa [#allocation3], 1

</llo_original>
